<compile_context>
chip_gen: v6e
topology: v6e:2x2x1
jax: 0.10.0
libtpu: 0.0.40
codegen_flags: <defaults>
</compile_context>

<pallas_src>
import functools

import jax
import jax.numpy as jnp
from jax import lax
from jax.experimental import pallas as pl
from jax.experimental.pallas import tpu as pltpu


def _mha_kernel(q_ref, k_ref, v_ref,
                wq_ref, bq_ref, wk_ref, bk_ref,
                wv_ref, bv_ref, wo_ref, bo_ref,
                out_ref,
                kcache_ref, vcache_ref, acc_ref, *, d_k):
    """One grid step = (batch b, query-tile qi, head h); h is innermost."""
    qi = pl.program_id(1)
    h = pl.program_id(2)
    inv_scale = 1.0 / (float(d_k) ** 0.5)

    # Initialize the output accumulator with the output-projection bias on the
    # first head step for this (b, qi) tile.
    @pl.when(h == 0)
    def _():
        acc_ref[...] = jnp.broadcast_to(bo_ref[...], acc_ref.shape)

    # Build this head's projected K/V cache once per batch (qi == 0); all later
    # query tiles of the same batch reuse it.  K/V input blocks are only DMA'd
    # when the batch index changes (constant index_map over qi, h).
    @pl.when(qi == 0)
    def _():
        k_in = k_ref[0]                                                  # (S, D) bf16
        v_in = v_ref[0]                                                  # (S, D) bf16
        kh_f32 = jnp.dot(k_in, wk_ref[h],
                         preferred_element_type=jnp.float32) + bk_ref[h]  # (S, d_k)
        vh_f32 = jnp.dot(v_in, wv_ref[h],
                         preferred_element_type=jnp.float32) + bv_ref[h]  # (S, d_k)
        kcache_ref[h] = kh_f32.astype(kcache_ref.dtype)
        vcache_ref[h] = vh_f32.astype(vcache_ref.dtype)

    # Per-head query projection (per query tile); fold 1/sqrt(d_k) into q once.
    q_in = q_ref[0]                                                       # (TQ, D) bf16
    qh = jnp.dot(q_in, wq_ref[h],
                 preferred_element_type=jnp.float32) + bq_ref[h]          # (TQ, d_k)
    qh = qh * inv_scale

    kh = kcache_ref[h]                                                    # (S, d_k) bf16
    vh = vcache_ref[h]                                                    # (S, d_k) bf16

    # Scores: contract on d_k for both operands (no explicit kh.T transpose).
    scores = lax.dot_general(
        qh.astype(jnp.bfloat16), kh,
        (((1,), (1,)), ((), ())),
        preferred_element_type=jnp.float32)                               # (TQ, S)

    # Numerically stable softmax statistics in f32.  The normalization divide
    # is applied AFTER the P.V matmul on the (TQ, d_k) tile (S/d_k fewer VPU
    # ops than scaling the (TQ, S) tile); numerically identical.
    m = jnp.max(scores, axis=-1, keepdims=True)
    e = jnp.exp(scores - m)
    denom = jnp.sum(e, axis=-1, keepdims=True)

    av = jnp.dot(e.astype(jnp.bfloat16), vh,
                 preferred_element_type=jnp.float32)                      # (TQ, d_k)
    av = av * pl.reciprocal(denom, approx=True)

    # This head's slice of the output projection, accumulated in model space.
    acc_ref[...] += jnp.dot(av.astype(jnp.bfloat16), wo_ref[h],
                            preferred_element_type=jnp.float32)           # (TQ, D)

    # Last head: write the finished tile.
    @pl.when(h == pl.num_programs(2) - 1)
    def _():
        out_ref[0] = acc_ref[...].astype(out_ref.dtype)


def mha_forward(Q, K, V, params, *, n_heads, q_tile=None):
    """Pallas MHA forward.  Q, K, V: (B, S, D)."""
    B, S, D = Q.shape
    assert D % n_heads == 0
    d_k = D // n_heads
    out_dtype = Q.dtype
    wq, bq, wk, bk, wv, bv, wo, bo = params

    # Query-tile size: largest 128-multiple divisor of S up to 512 (keeps MXU
    # efficiency while bounding the f32 (TQ, S) softmax temporaries for v7x's
    # 64 MiB VMEM); full S for short / awkward sequence lengths.
    if q_tile is None:
        q_tile = S
        for cand in (512, 256, 128):
            if S % cand == 0:
                q_tile = cand
                break
    assert S % q_tile == 0
    n_q = S // q_tile

    bf = jnp.bfloat16
    # Activations to bf16 in the wrapper: halves HBM->VMEM DMA and VMEM residency.
    Qb = Q.astype(bf)
    Kb = K.astype(bf)
    Vb = V.astype(bf)

    # Head-major parameter layouts (cheap one-time XLA reshapes of small tensors).
    # Linear weights are (d_in, d_out); output columns h*d_k:(h+1)*d_k are head h.
    wq3 = wq.reshape(D, n_heads, d_k).transpose(1, 0, 2).astype(bf)   # (H, D, d_k)
    wk3 = wk.reshape(D, n_heads, d_k).transpose(1, 0, 2).astype(bf)   # (H, D, d_k)
    wv3 = wv.reshape(D, n_heads, d_k).transpose(1, 0, 2).astype(bf)   # (H, D, d_k)
    wo3 = wo.reshape(n_heads, d_k, D).astype(bf)                      # (H, d_k, D)
    bq3 = bq.reshape(n_heads, 1, d_k).astype(jnp.float32)             # (H, 1, d_k)
    bk3 = bk.reshape(n_heads, 1, d_k).astype(jnp.float32)
    bv3 = bv.reshape(n_heads, 1, d_k).astype(jnp.float32)
    bo2 = bo.reshape(1, D).astype(jnp.float32)                        # lane-dense (1, D)

    kernel = functools.partial(_mha_kernel, d_k=d_k)

    # Q / K / V activation tiles.
    q_spec = pl.BlockSpec((1, q_tile, D), lambda b, qi, h: (b, qi, 0))
    kv_spec = pl.BlockSpec((1, S, D), lambda b, qi, h: (b, 0, 0))
    # Weights / biases: full-extent blocks with constant index maps -> DMA'd to
    # VMEM once for the whole grid (no re-streaming per (b, qi)); the head is
    # selected inside the kernel with a cheap leading-axis index.
    w_in_spec = pl.BlockSpec((n_heads, D, d_k), lambda b, qi, h: (0, 0, 0))
    b_in_spec = pl.BlockSpec((n_heads, 1, d_k), lambda b, qi, h: (0, 0, 0))
    w_out_spec = pl.BlockSpec((n_heads, d_k, D), lambda b, qi, h: (0, 0, 0))
    b_out_spec = pl.BlockSpec((1, D), lambda b, qi, h: (0, 0))
    out_spec = pl.BlockSpec((1, q_tile, D), lambda b, qi, h: (b, qi, 0))

    # Rough per-step VMEM budget (double-buffered activation/weight blocks +
    # caches + f32 temporaries), clamped to leave headroom on v7x's 64 MiB.
    vmem_need = (2 * q_tile * D * 2            # Q blocks (bf16, 2 buffers)
                 + 2 * 2 * S * D * 2           # K, V blocks (bf16, 2 buffers)
                 + 2 * 4 * D * D * 2           # resident QKVO weights (2 buffers)
                 + 2 * q_tile * D * 4          # output blocks (f32, 2 buffers)
                 + 2 * S * D * 2               # projected K/V caches (bf16)
                 + q_tile * D * 4              # f32 accumulator
                 + 3 * q_tile * S * 4)         # f32 scores / exp temporaries
    vmem_limit = int(min(max(vmem_need * 5 // 4, 32 * 1024 * 1024),
                         56 * 1024 * 1024))

    # Advisory cost estimate so XLA overlaps surrounding HLO with the kernel.
    flops = 8 * B * S * D * D + 4 * B * S * S * D
    transcendentals = B * n_heads * S * S
    bytes_accessed = (3 * B * S * D * 2        # bf16 Q/K/V in
                      + 4 * D * D * 2          # bf16 weights
                      + 4 * D * 4              # f32 biases
                      + B * S * D * 4)         # f32 output
    cost = pl.CostEstimate(flops=int(flops),
                           transcendentals=int(transcendentals),
                           bytes_accessed=int(bytes_accessed))

    return pl.pallas_call(
        kernel,
        out_shape=jax.ShapeDtypeStruct((B, S, D), out_dtype),
        grid_spec=pltpu.PrefetchScalarGridSpec(
            num_scalar_prefetch=0,
            grid=(B, n_q, n_heads),
            in_specs=[q_spec, kv_spec, kv_spec,
                      w_in_spec, b_in_spec, w_in_spec, b_in_spec,
                      w_in_spec, b_in_spec, w_out_spec, b_out_spec],
            out_specs=out_spec,
            scratch_shapes=[
                pltpu.VMEM((n_heads, S, d_k), jnp.bfloat16),   # projected K cache
                pltpu.VMEM((n_heads, S, d_k), jnp.bfloat16),   # projected V cache
                pltpu.VMEM((q_tile, D), jnp.float32),          # output accumulator
            ]),
        compiler_params=pltpu.CompilerParams(
            # qi must stay "arbitrary": the K/V cache is built at qi == 0 and
            # would be invalid if the qi axis were split across v7x cores.
            dimension_semantics=("parallel", "arbitrary", "arbitrary"),
            vmem_limit_bytes=vmem_limit),
        cost_estimate=cost,
    )(Qb, Kb, Vb, wq3, bq3, wk3, bk3, wv3, bv3, wo3, bo2)


def mha_reference(Q, K, V, params, *, n_heads):
    """Pure-JAX (f32) reference matching the PyTorch semantics."""
    B, S, D = Q.shape
    d_k = D // n_heads
    wq, bq, wk, bk, wv, bv, wo, bo = params
    q = Q @ wq + bq
    k = K @ wk + bk
    v = V @ wv + bv
    q = q.reshape(B, S, n_heads, d_k).transpose(0, 2, 1, 3)
    k = k.reshape(B, S, n_heads, d_k).transpose(0, 2, 1, 3)
    v = v.reshape(B, S, n_heads, d_k).transpose(0, 2, 1, 3)
    scores = jnp.einsum("bhqd,bhkd->bhqk", q, k) / (d_k ** 0.5)
    w = jax.nn.softmax(scores, axis=-1)
    av = jnp.einsum("bhqk,bhkd->bhqd", w, v)
    concat = av.transpose(0, 2, 1, 3).reshape(B, S, D)
    return concat @ wo + bo


if __name__ == "__main__":
    # Small config consistent with the module: d_model divisible by n_heads.
    B, S, D = 2, 8, 32
    n_heads = 4

    key = jax.random.PRNGKey(0)
    keys = jax.random.split(key, 12)

    Q = jax.random.normal(keys[0], (B, S, D), dtype=jnp.float32)
    K = jax.random.normal(keys[1], (B, S, D), dtype=jnp.float32)
    V = jax.random.normal(keys[2], (B, S, D), dtype=jnp.float32)

    # Deterministic parameter init (Linear weights stored as (in, out)).
    scale_w = 1.0 / (D ** 0.5)
    wq = jax.random.uniform(keys[3], (D, D), jnp.float32, -scale_w, scale_w)
    bq = jax.random.uniform(keys[4], (D,), jnp.float32, -scale_w, scale_w)
    wk = jax.random.uniform(keys[5], (D, D), jnp.float32, -scale_w, scale_w)
    bk = jax.random.uniform(keys[6], (D,), jnp.float32, -scale_w, scale_w)
    wv = jax.random.uniform(keys[7], (D, D), jnp.float32, -scale_w, scale_w)
    bv = jax.random.uniform(keys[8], (D,), jnp.float32, -scale_w, scale_w)
    wo = jax.random.uniform(keys[9], (D, D), jnp.float32, -scale_w, scale_w)
    bo = jax.random.uniform(keys[10], (D,), jnp.float32, -scale_w, scale_w)
    params = (wq, bq, wk, bk, wv, bv, wo, bo)

    out = mha_forward(Q, K, V, params, n_heads=n_heads)
    out = jax.block_until_ready(out)

    ref = mha_reference(Q, K, V, params, n_heads=n_heads)
    assert out.shape == (B, S, D)
    # bf16 MXU operands + approx reciprocal -> loosened tolerance vs f32 reference.
    assert jnp.allclose(out, ref, atol=5e-2, rtol=5e-2), "mismatch vs reference"

    print("KERNEL_OK")
</pallas_src>

<mosaic_0001>
module attributes {stable_mosaic.version = 11 : i64} {
  func.func @_mha_kernel(%arg0: i32, %arg1: i32, %arg2: i32, %arg3: memref<1x8x32xbf16, #tpu.memory_space<vmem>>, %arg4: memref<1x8x32xbf16, #tpu.memory_space<vmem>>, %arg5: memref<1x8x32xbf16, #tpu.memory_space<vmem>>, %arg6: memref<4x32x8xbf16, #tpu.memory_space<vmem>>, %arg7: memref<4x1x8xf32, #tpu.memory_space<vmem>>, %arg8: memref<4x32x8xbf16, #tpu.memory_space<vmem>>, %arg9: memref<4x1x8xf32, #tpu.memory_space<vmem>>, %arg10: memref<4x32x8xbf16, #tpu.memory_space<vmem>>, %arg11: memref<4x1x8xf32, #tpu.memory_space<vmem>>, %arg12: memref<4x8x32xbf16, #tpu.memory_space<vmem>>, %arg13: memref<1x32xf32, #tpu.memory_space<vmem>>, %arg14: memref<1x8x32xf32, #tpu.memory_space<vmem>>, %arg15: memref<4x8x8xbf16, #tpu.memory_space<vmem>>, %arg16: memref<4x8x8xbf16, #tpu.memory_space<vmem>>, %arg17: memref<8x32xf32, #tpu.memory_space<vmem>>) attributes {dimension_semantics = [#tpu.dimension_semantics<parallel>, #tpu.dimension_semantics<arbitrary>, #tpu.dimension_semantics<arbitrary>], iteration_bounds = array<i64: 2, 1, 4>, scalar_prefetch = 0 : i64, scratch_operands = 3 : i64, tpu.core_type = #tpu.core_type<tc>, window_params = [{transform_indices = @transform_0, window_bounds = array<i64: 1, 8, 32>}, {transform_indices = @transform_1, window_bounds = array<i64: 1, 8, 32>}, {transform_indices = @transform_2, window_bounds = array<i64: 1, 8, 32>}, {pipeline_mode = #tpu.pipeline_mode<synchronous>, transform_indices = @transform_3, window_bounds = array<i64: 4, 32, 8>}, {pipeline_mode = #tpu.pipeline_mode<synchronous>, transform_indices = @transform_4, window_bounds = array<i64: 4, 1, 8>}, {pipeline_mode = #tpu.pipeline_mode<synchronous>, transform_indices = @transform_5, window_bounds = array<i64: 4, 32, 8>}, {pipeline_mode = #tpu.pipeline_mode<synchronous>, transform_indices = @transform_6, window_bounds = array<i64: 4, 1, 8>}, {pipeline_mode = #tpu.pipeline_mode<synchronous>, transform_indices = @transform_7, window_bounds = array<i64: 4, 32, 8>}, {pipeline_mode = #tpu.pipeline_mode<synchronous>, transform_indices = @transform_8, window_bounds = array<i64: 4, 1, 8>}, {pipeline_mode = #tpu.pipeline_mode<synchronous>, transform_indices = @transform_9, window_bounds = array<i64: 4, 8, 32>}, {pipeline_mode = #tpu.pipeline_mode<synchronous>, transform_indices = @transform_10, window_bounds = array<i64: 1, 32>}, {transform_indices = @transform_11, window_bounds = array<i64: 1, 8, 32>}]} {
    %c0_i32 = arith.constant 0 : i32
    %0 = arith.cmpi eq, %arg2, %c0_i32 : i32
    %1 = arith.extui %0 : i1 to i32
    %c0_i32_0 = arith.constant 0 : i32
    %2 = arith.cmpi ne, %1, %c0_i32_0 : i32
    scf.if %2 {
      %c0_26 = arith.constant 0 : index
      %c0_27 = arith.constant 0 : index
      %50 = vector.load %arg13[%c0_26, %c0_27] : memref<1x32xf32, #tpu.memory_space<vmem>>, vector<1x32xf32>
      %51 = vector.shape_cast %50 : vector<1x32xf32> to vector<1x32xf32>
      %52 = vector.broadcast %51 : vector<1x32xf32> to vector<8x32xf32>
      %c0_28 = arith.constant 0 : index
      %c0_29 = arith.constant 0 : index
      %53 = vector.load %arg17[%c0_28, %c0_29] : memref<8x32xf32, #tpu.memory_space<vmem>>, vector<8x32xf32>
      tpu.vector_store %arg17[%c0_28, %c0_29], %52 {strides = array<i32>} : memref<8x32xf32, #tpu.memory_space<vmem>>, vector<8x32xf32>,
    } else {
    }
    %c0_i32_1 = arith.constant 0 : i32
    %3 = arith.cmpi eq, %arg1, %c0_i32_1 : i32
    %4 = arith.extui %3 : i1 to i32
    %c0_i32_2 = arith.constant 0 : i32
    %5 = arith.cmpi ne, %4, %c0_i32_2 : i32
    scf.if %5 {
      %c0_26 = arith.constant 0 : index
      %c0_27 = arith.constant 0 : index
      %c0_28 = arith.constant 0 : index
      %50 = vector.load %arg4[%c0_26, %c0_27, %c0_28] : memref<1x8x32xbf16, #tpu.memory_space<vmem>>, vector<1x8x32xbf16>
      %51 = vector.shape_cast %50 : vector<1x8x32xbf16> to vector<8x32xbf16>
      %c0_29 = arith.constant 0 : index
      %c0_30 = arith.constant 0 : index
      %c0_31 = arith.constant 0 : index
      %52 = vector.load %arg5[%c0_29, %c0_30, %c0_31] : memref<1x8x32xbf16, #tpu.memory_space<vmem>>, vector<1x8x32xbf16>
      %53 = vector.shape_cast %52 : vector<1x8x32xbf16> to vector<8x32xbf16>
      %54 = arith.index_cast %arg2 : i32 to index
      %c0_32 = arith.constant 0 : index
      %c0_33 = arith.constant 0 : index
      %55 = vector.load %arg8[%54, %c0_32, %c0_33] : memref<4x32x8xbf16, #tpu.memory_space<vmem>>, vector<1x32x8xbf16>
      %56 = vector.shape_cast %55 : vector<1x32x8xbf16> to vector<32x8xbf16>
      %cst_34 = arith.constant dense<0.000000e+00> : vector<8x8xf32>
      %57 = tpu.matmul %51, %56, %cst_34 {dimension_numbers = #tpu.dot_dimension_numbers<[1], [0], [0], [1], [0, 0, 1, 1], [], []>} : vector<8x32xbf16>, vector<32x8xbf16>, vector<8x8xf32> -> vector<8x8xf32>
      %58 = arith.index_cast %arg2 : i32 to index
      %c0_35 = arith.constant 0 : index
      %c0_36 = arith.constant 0 : index
      %59 = vector.load %arg9[%58, %c0_35, %c0_36] : memref<4x1x8xf32, #tpu.memory_space<vmem>>, vector<1x1x8xf32>
      %60 = vector.shape_cast %59 : vector<1x1x8xf32> to vector<1x8xf32>
      %61 = vector.broadcast %60 : vector<1x8xf32> to vector<8x8xf32>
      %62 = arith.addf %57, %61 : vector<8x8xf32>
      %63 = arith.index_cast %arg2 : i32 to index
      %c0_37 = arith.constant 0 : index
      %c0_38 = arith.constant 0 : index
      %64 = vector.load %arg10[%63, %c0_37, %c0_38] : memref<4x32x8xbf16, #tpu.memory_space<vmem>>, vector<1x32x8xbf16>
      %65 = vector.shape_cast %64 : vector<1x32x8xbf16> to vector<32x8xbf16>
      %cst_39 = arith.constant dense<0.000000e+00> : vector<8x8xf32>
      %66 = tpu.matmul %53, %65, %cst_39 {dimension_numbers = #tpu.dot_dimension_numbers<[1], [0], [0], [1], [0, 0, 1, 1], [], []>} : vector<8x32xbf16>, vector<32x8xbf16>, vector<8x8xf32> -> vector<8x8xf32>
      %67 = arith.index_cast %arg2 : i32 to index
      %c0_40 = arith.constant 0 : index
      %c0_41 = arith.constant 0 : index
      %68 = vector.load %arg11[%67, %c0_40, %c0_41] : memref<4x1x8xf32, #tpu.memory_space<vmem>>, vector<1x1x8xf32>
      %69 = vector.shape_cast %68 : vector<1x1x8xf32> to vector<1x8xf32>
      %70 = vector.broadcast %69 : vector<1x8xf32> to vector<8x8xf32>
      %71 = arith.addf %66, %70 : vector<8x8xf32>
      %72 = arith.truncf %62 : vector<8x8xf32> to vector<8x8xbf16>
      %73 = arith.index_cast %arg2 : i32 to index
      %c0_42 = arith.constant 0 : index
      %c0_43 = arith.constant 0 : index
      %74 = vector.load %arg15[%73, %c0_42, %c0_43] : memref<4x8x8xbf16, #tpu.memory_space<vmem>>, vector<1x8x8xbf16>
      %75 = vector.shape_cast %74 : vector<1x8x8xbf16> to vector<8x8xbf16>
      %76 = vector.shape_cast %72 : vector<8x8xbf16> to vector<1x8x8xbf16>
      tpu.vector_store %arg15[%73, %c0_42, %c0_43], %76 {strides = array<i32>} : memref<4x8x8xbf16, #tpu.memory_space<vmem>>, vector<1x8x8xbf16>,
      %77 = arith.truncf %71 : vector<8x8xf32> to vector<8x8xbf16>
      %78 = arith.index_cast %arg2 : i32 to index
      %c0_44 = arith.constant 0 : index
      %c0_45 = arith.constant 0 : index
      %79 = vector.load %arg16[%78, %c0_44, %c0_45] : memref<4x8x8xbf16, #tpu.memory_space<vmem>>, vector<1x8x8xbf16>
      %80 = vector.shape_cast %79 : vector<1x8x8xbf16> to vector<8x8xbf16>
      %81 = vector.shape_cast %77 : vector<8x8xbf16> to vector<1x8x8xbf16>
      tpu.vector_store %arg16[%78, %c0_44, %c0_45], %81 {strides = array<i32>} : memref<4x8x8xbf16, #tpu.memory_space<vmem>>, vector<1x8x8xbf16>,
    } else {
    }
    %c0 = arith.constant 0 : index
    %c0_3 = arith.constant 0 : index
    %c0_4 = arith.constant 0 : index
    %6 = vector.load %arg3[%c0, %c0_3, %c0_4] : memref<1x8x32xbf16, #tpu.memory_space<vmem>>, vector<1x8x32xbf16>
    %7 = vector.shape_cast %6 : vector<1x8x32xbf16> to vector<8x32xbf16>
    %8 = arith.index_cast %arg2 : i32 to index
    %c0_5 = arith.constant 0 : index
    %c0_6 = arith.constant 0 : index
    %9 = vector.load %arg6[%8, %c0_5, %c0_6] : memref<4x32x8xbf16, #tpu.memory_space<vmem>>, vector<1x32x8xbf16>
    %10 = vector.shape_cast %9 : vector<1x32x8xbf16> to vector<32x8xbf16>
    %cst = arith.constant dense<0.000000e+00> : vector<8x8xf32>
    %11 = tpu.matmul %7, %10, %cst {dimension_numbers = #tpu.dot_dimension_numbers<[1], [0], [0], [1], [0, 0, 1, 1], [], []>} : vector<8x32xbf16>, vector<32x8xbf16>, vector<8x8xf32> -> vector<8x8xf32>
    %12 = arith.index_cast %arg2 : i32 to index
    %c0_7 = arith.constant 0 : index
    %c0_8 = arith.constant 0 : index
    %13 = vector.load %arg7[%12, %c0_7, %c0_8] : memref<4x1x8xf32, #tpu.memory_space<vmem>>, vector<1x1x8xf32>
    %14 = vector.shape_cast %13 : vector<1x1x8xf32> to vector<1x8xf32>
    %15 = vector.broadcast %14 : vector<1x8xf32> to vector<8x8xf32>
    %16 = arith.addf %11, %15 : vector<8x8xf32>
    %cst_9 = arith.constant 0.353553385 : f32
    %17 = vector.broadcast %cst_9 : f32 to vector<8x8xf32>
    %18 = arith.mulf %16, %17 : vector<8x8xf32>
    %19 = arith.index_cast %arg2 : i32 to index
    %c0_10 = arith.constant 0 : index
    %c0_11 = arith.constant 0 : index
    %20 = vector.load %arg15[%19, %c0_10, %c0_11] : memref<4x8x8xbf16, #tpu.memory_space<vmem>>, vector<1x8x8xbf16>
    %21 = vector.shape_cast %20 : vector<1x8x8xbf16> to vector<8x8xbf16>
    %22 = arith.index_cast %arg2 : i32 to index
    %c0_12 = arith.constant 0 : index
    %c0_13 = arith.constant 0 : index
    %23 = vector.load %arg16[%22, %c0_12, %c0_13] : memref<4x8x8xbf16, #tpu.memory_space<vmem>>, vector<1x8x8xbf16>
    %24 = vector.shape_cast %23 : vector<1x8x8xbf16> to vector<8x8xbf16>
    %25 = arith.truncf %18 : vector<8x8xf32> to vector<8x8xbf16>
    %cst_14 = arith.constant dense<0.000000e+00> : vector<8x8xf32>
    %26 = tpu.matmul %25, %21, %cst_14 {dimension_numbers = #tpu.dot_dimension_numbers<[1], [1], [0], [0], [0, 0, 1, 0], [], []>} : vector<8x8xbf16>, vector<8x8xbf16>, vector<8x8xf32> -> vector<8x8xf32>
    %cst_15 = arith.constant dense<0xFF800000> : vector<8xf32>
    %27 = vector.multi_reduction <maximumf>, %26, %cst_15 [1] : vector<8x8xf32> to vector<8xf32>
    %28 = vector.shape_cast %27 : vector<8xf32> to vector<8x1xf32>
    %29 = vector.broadcast %28 : vector<8x1xf32> to vector<8x8xf32>
    %30 = arith.subf %26, %29 : vector<8x8xf32>
    %31 = math.exp %30 : vector<8x8xf32>
    %cst_16 = arith.constant dense<0.000000e+00> : vector<8xf32>
    %32 = vector.multi_reduction <add>, %31, %cst_16 [1] : vector<8x8xf32> to vector<8xf32>
    %33 = vector.shape_cast %32 : vector<8xf32> to vector<8x1xf32>
    %34 = arith.truncf %31 : vector<8x8xf32> to vector<8x8xbf16>
    %cst_17 = arith.constant dense<0.000000e+00> : vector<8x8xf32>
    %35 = tpu.matmul %34, %24, %cst_17 {dimension_numbers = #tpu.dot_dimension_numbers<[1], [0], [0], [1], [0, 0, 1, 1], [], []>} : vector<8x8xbf16>, vector<8x8xbf16>, vector<8x8xf32> -> vector<8x8xf32>
    %36 = tpu.reciprocal %33 {approx = true} : vector<8x1xf32> -> vector<8x1xf32>
    %37 = vector.broadcast %36 : vector<8x1xf32> to vector<8x8xf32>
    %38 = arith.mulf %35, %37 : vector<8x8xf32>
    %c0_18 = arith.constant 0 : index
    %c0_19 = arith.constant 0 : index
    %39 = vector.load %arg17[%c0_18, %c0_19] : memref<8x32xf32, #tpu.memory_space<vmem>>, vector<8x32xf32>
    %40 = arith.truncf %38 : vector<8x8xf32> to vector<8x8xbf16>
    %41 = arith.index_cast %arg2 : i32 to index
    %c0_20 = arith.constant 0 : index
    %c0_21 = arith.constant 0 : index
    %42 = vector.load %arg12[%41, %c0_20, %c0_21] : memref<4x8x32xbf16, #tpu.memory_space<vmem>>, vector<1x8x32xbf16>
    %43 = vector.shape_cast %42 : vector<1x8x32xbf16> to vector<8x32xbf16>
    %cst_22 = arith.constant dense<0.000000e+00> : vector<8x32xf32>
    %44 = tpu.matmul %40, %43, %cst_22 {dimension_numbers = #tpu.dot_dimension_numbers<[1], [0], [0], [1], [0, 0, 1, 1], [], []>} : vector<8x8xbf16>, vector<8x32xbf16>, vector<8x32xf32> -> vector<8x32xf32>
    %45 = arith.addf %39, %44 : vector<8x32xf32>
    %c0_23 = arith.constant 0 : index
    %c0_24 = arith.constant 0 : index
    %46 = vector.load %arg17[%c0_23, %c0_24] : memref<8x32xf32, #tpu.memory_space<vmem>>, vector<8x32xf32>
    tpu.vector_store %arg17[%c0_23, %c0_24], %45 {strides = array<i32>} : memref<8x32xf32, #tpu.memory_space<vmem>>, vector<8x32xf32>,
    %c3_i32 = arith.constant 3 : i32
    %47 = arith.cmpi eq, %arg2, %c3_i32 : i32
    %48 = arith.extui %47 : i1 to i32
    %c0_i32_25 = arith.constant 0 : i32
    %49 = arith.cmpi ne, %48, %c0_i32_25 : i32
    scf.if %49 {
      %c0_26 = arith.constant 0 : index
      %c0_27 = arith.constant 0 : index
      %50 = vector.load %arg17[%c0_26, %c0_27] : memref<8x32xf32, #tpu.memory_space<vmem>>, vector<8x32xf32>
      %c0_28 = arith.constant 0 : index
      %c0_29 = arith.constant 0 : index
      %c0_30 = arith.constant 0 : index
      %51 = vector.load %arg14[%c0_28, %c0_29, %c0_30] : memref<1x8x32xf32, #tpu.memory_space<vmem>>, vector<1x8x32xf32>
      %52 = vector.shape_cast %51 : vector<1x8x32xf32> to vector<8x32xf32>
      %53 = vector.shape_cast %50 : vector<8x32xf32> to vector<1x8x32xf32>
      tpu.vector_store %arg14[%c0_28, %c0_29, %c0_30], %53 {strides = array<i32>} : memref<1x8x32xf32, #tpu.memory_space<vmem>>, vector<1x8x32xf32>,
    } else {
    }
    return
  }
  func.func @transform_0(%arg0: i32, %arg1: i32, %arg2: i32) -> (i32, i32, i32) {
    %c0_i32 = arith.constant 0 : i32
    %c0_i32_0 = arith.constant 0 : i32
    return %arg0, %arg1, %c0_i32 : i32, i32, i32
  }
  func.func @transform_1(%arg0: i32, %arg1: i32, %arg2: i32) -> (i32, i32, i32) {
    %c0_i32 = arith.constant 0 : i32
    %c0_i32_0 = arith.constant 0 : i32
    %c0_i32_1 = arith.constant 0 : i32
    return %arg0, %c0_i32, %c0_i32_0 : i32, i32, i32
  }
  func.func @transform_2(%arg0: i32, %arg1: i32, %arg2: i32) -> (i32, i32, i32) {
    %c0_i32 = arith.constant 0 : i32
    %c0_i32_0 = arith.constant 0 : i32
    %c0_i32_1 = arith.constant 0 : i32
    return %arg0, %c0_i32, %c0_i32_0 : i32, i32, i32
  }
  func.func @transform_3(%arg0: i32, %arg1: i32, %arg2: i32) -> (i32, i32, i32) {
    %c0_i32 = arith.constant 0 : i32
    %c0_i32_0 = arith.constant 0 : i32
    %c0_i32_1 = arith.constant 0 : i32
    %c0_i32_2 = arith.constant 0 : i32
    return %c0_i32, %c0_i32_0, %c0_i32_1 : i32, i32, i32
  }
  func.func @transform_4(%arg0: i32, %arg1: i32, %arg2: i32) -> (i32, i32, i32) {
    %c0_i32 = arith.constant 0 : i32
    %c0_i32_0 = arith.constant 0 : i32
    %c0_i32_1 = arith.constant 0 : i32
    %c0_i32_2 = arith.constant 0 : i32
    return %c0_i32, %c0_i32_0, %c0_i32_1 : i32, i32, i32
  }
  func.func @transform_5(%arg0: i32, %arg1: i32, %arg2: i32) -> (i32, i32, i32) {
    %c0_i32 = arith.constant 0 : i32
    %c0_i32_0 = arith.constant 0 : i32
    %c0_i32_1 = arith.constant 0 : i32
    %c0_i32_2 = arith.constant 0 : i32
    return %c0_i32, %c0_i32_0, %c0_i32_1 : i32, i32, i32
  }
  func.func @transform_6(%arg0: i32, %arg1: i32, %arg2: i32) -> (i32, i32, i32) {
    %c0_i32 = arith.constant 0 : i32
    %c0_i32_0 = arith.constant 0 : i32
    %c0_i32_1 = arith.constant 0 : i32
    %c0_i32_2 = arith.constant 0 : i32
    return %c0_i32, %c0_i32_0, %c0_i32_1 : i32, i32, i32
  }
  func.func @transform_7(%arg0: i32, %arg1: i32, %arg2: i32) -> (i32, i32, i32) {
    %c0_i32 = arith.constant 0 : i32
    %c0_i32_0 = arith.constant 0 : i32
    %c0_i32_1 = arith.constant 0 : i32
    %c0_i32_2 = arith.constant 0 : i32
    return %c0_i32, %c0_i32_0, %c0_i32_1 : i32, i32, i32
  }
  func.func @transform_8(%arg0: i32, %arg1: i32, %arg2: i32) -> (i32, i32, i32) {
    %c0_i32 = arith.constant 0 : i32
    %c0_i32_0 = arith.constant 0 : i32
    %c0_i32_1 = arith.constant 0 : i32
    %c0_i32_2 = arith.constant 0 : i32
    return %c0_i32, %c0_i32_0, %c0_i32_1 : i32, i32, i32
  }
  func.func @transform_9(%arg0: i32, %arg1: i32, %arg2: i32) -> (i32, i32, i32) {
    %c0_i32 = arith.constant 0 : i32
    %c0_i32_0 = arith.constant 0 : i32
    %c0_i32_1 = arith.constant 0 : i32
    %c0_i32_2 = arith.constant 0 : i32
    return %c0_i32, %c0_i32_0, %c0_i32_1 : i32, i32, i32
  }
  func.func @transform_10(%arg0: i32, %arg1: i32, %arg2: i32) -> (i32, i32) {
    %c0_i32 = arith.constant 0 : i32
    %c0_i32_0 = arith.constant 0 : i32
    %c0_i32_1 = arith.constant 0 : i32
    return %c0_i32, %c0_i32_0 : i32, i32
  }
  func.func @transform_11(%arg0: i32, %arg1: i32, %arg2: i32) -> (i32, i32, i32) {
    %c0_i32 = arith.constant 0 : i32
    %c0_i32_0 = arith.constant 0 : i32
    return %arg0, %arg1, %c0_i32 : i32, i32, i32
  }
}

</mosaic_0001>

<llo_original>
// kernel: tpu_custom_call.1
$region0: #{tpu_custom_call.1}
  #allocation0 [shape = 'u32[]', space=smem, size = 0x4, offset = 0x4, fixed_abs, tag = 'smem constant byte address 0x4 - core index']
  #allocation1 [shape = 'u32[144,128]{1,0:T(1,128)}', space=vmem, size = 0x12000, scoped, tag = 'internal scratch']
  #allocation2 [shape = 'bf16[4,8,8]{2,1,0:T(8,128)(2,1)}', space=vmem, size = 0x2000, scoped, tag = 'scratch operand']
  #allocation3 [shape = 'bf16[4,8,8]{2,1,0:T(8,128)(2,1)}', space=vmem, size = 0x2000, scoped, tag = 'scratch operand']
  #allocation4 [shape = 'f32[8,32]{1,0:T(8,128)}', space=vmem, size = 0x1000, scoped, tag = 'scratch operand']
  %s0 = inlined_call_operand.vmem [shape: bf16[2,8,32], index: 0, kind: input, shape index: {}]
  %s1 = inlined_call_operand.vmem [shape: bf16[2,8,32], index: 1, kind: input, shape index: {}]
  %s2 = inlined_call_operand.vmem [shape: bf16[2,8,32], index: 2, kind: input, shape index: {}]
  %s3 = inlined_call_operand.vmem [shape: bf16[4,32,8], index: 3, kind: input, shape index: {}]
  %s4 = inlined_call_operand.vmem [shape: f32[4,1,8], index: 4, kind: input, shape index: {}]
  %s5 = inlined_call_operand.vmem [shape: bf16[4,32,8], index: 5, kind: input, shape index: {}]
  %s6 = inlined_call_operand.vmem [shape: f32[4,1,8], index: 6, kind: input, shape index: {}]
  %s7 = inlined_call_operand.vmem [shape: bf16[4,32,8], index: 7, kind: input, shape index: {}]
  %s8 = inlined_call_operand.vmem [shape: f32[4,1,8], index: 8, kind: input, shape index: {}]
  %s9 = inlined_call_operand.vmem [shape: bf16[4,8,32], index: 9, kind: input, shape index: {}]
  %s10 = inlined_call_operand.vmem [shape: f32[1,32], index: 10, kind: input, shape index: {}]
  %s11 = inlined_call_operand.hbm [shape: f32[2,8,32], index: 11, kind: output, shape index: {}]
  %s12 = sld [smem:[#allocation0]]
  $region89: #{tpu_custom_call.1} parent=0
    _
  %s14 = ssub.s32 1, %s12
  %s15 = scalar_select 0, %s14, %s12
  $region1: #{tpu_custom_call.1} parent=0
    #allocation5 [shape = 'u8[8192]{0}', space=vmem, size = 0x2000, scoped, tag = 'output window, operand 0']
    #allocation6 [shape = 's32[2]{0}', space=sflag, size = 0x8, scoped, tag = 'scoped memory for tpu_custom_call.1']
    %16 = vsyncpa [#allocation6], 0
    %s17 = scalar_lea.sflag [#allocation6], 1
    %18 = vsyncpa %s17, 0
    loop: start=0, step=1, limit=10
    $region2: #{tpu_custom_call.1} parent=1 // loop_pre_header
      _
    $region3: #{tpu_custom_call.1} parent=1 // loop_header
      %s20 = sphi 0, %s24
      %p21 = scmp.ge.s32.totalorder %s20, 10
      %s27 = sphi 0, %s46
      %s28 = sphi 0, %s42
      %s29 = sphi 0, %s38
      %s30 = sphi 0, %s27
      %s31 = sphi 0, %s28
      %s32 = sphi 0, %s29
      %s33 = sphi 0, %s30
      %s34 = sphi 0, %s31
      %s35 = sphi 0, %s32
      %s51 = sphi 0, %s53
      %s54 = sphi 0, %s51
      %s55 = sphi 0, %s54
      %s71 = sphi 0, %s55
      %s77 = sphi 0, %s79
      %s80 = sphi 0, %s77
      %s81 = sphi 0, %s80
      %s97 = sphi 0, %s81
      %s103 = sphi 0, %s105
      %s106 = sphi 0, %s103
      %s107 = sphi 0, %s106
      %s123 = sphi 0, %s107
      %s127 = sphi 0, %s127
      %s129 = sphi 0, %s127
      %s130 = sphi 0, %s129
      %s144 = sphi 0, %s130
      %s148 = sphi 0, %s148
      %s150 = sphi 0, %s148
      %s151 = sphi 0, %s150
      %s165 = sphi 0, %s151
      %s169 = sphi 0, %s169
      %s171 = sphi 0, %s169
      %s172 = sphi 0, %s171
      %s186 = sphi 0, %s172
      %s190 = sphi 0, %s190
      %s192 = sphi 0, %s190
      %s193 = sphi 0, %s192
      %s207 = sphi 0, %s193
      %s211 = sphi 0, %s211
      %s213 = sphi 0, %s211
      %s214 = sphi 0, %s213
      %s228 = sphi 0, %s214
      %s232 = sphi 0, %s232
      %s234 = sphi 0, %s232
      %s235 = sphi 0, %s234
      %s249 = sphi 0, %s235
      %s253 = sphi 0, %s253
      %s255 = sphi 0, %s253
      %s256 = sphi 0, %s255
      %s270 = sphi 0, %s256
      %s274 = sphi 0, %s274
      %s276 = sphi 0, %s274
      %s277 = sphi 0, %s276
      %s291 = sphi 0, %s277
      %s299 = sphi 0, %s301
      %s302 = sphi 0, %s299
      %s303 = sphi 0, %s302
      %s319 = sphi 0, %s303
    $region4: #{tpu_custom_call.1} parent=1 // loop_header_branch
      %23 = sbr.rel (%p21) target = $region8
    $region5: #{tpu_custom_call.1} parent=1 // loop_body
      %s25 = ssub.s32 %s20, 1
      %s26 = ssub.s32 %s20, 2
      %s36 = sadd.s32 1, %s29
      %p37 = scmp.ge.s32.totalorder %s36, 4
      %s38 = scalar_select %p37, 0, %s36
      %s39 = sadd.s32 1, %s28
      %s40 = scalar_select %p37, %s39, %s28
      %p41 = scmp.ge.s32.totalorder %s40, 1
      %s42 = scalar_select %p41, 0, %s40
      %s43 = sadd.s32 1, %s27
      %s44 = scalar_select %p41, %s43, %s27
      %p45 = scmp.ge.s32.totalorder %s44, 2
      %s46 = scalar_select %p45, 0, %s44
      %s47 = ssub.s32 %s27, %s46
      %s48 = ssub.s32 %s28, %s42
      %s49 = sor.u32 %s47, %s48
      %p50 = scmp.eq.s32.totalorder %s49, 0
      %s52 = sadd.s32 %s51, 1
      %s53 = scalar_select %p50, %s51, %s52
      %p56 = pneg %p50
      %p57 = scmp.eq.s32.totalorder %s20, 7
      %p58 = por %p56, %p57
      %p59 = scmp.ne.s32.totalorder %s51, %s54
      %p60 = scmp.eq.s32.totalorder %s20, 0
      %p61 = por %p59, %p60
      %p62 = scmp.ne.s32.totalorder %s51, %s54
      %p63 = scmp.eq.s32.totalorder %s25, 7
      %p64 = por %p62, %p63
      %p65 = scmp.ne.s32.totalorder %s54, %s55
      %p66 = scmp.eq.s32.totalorder %s25, 0
      %p67 = por %p65, %p66
      %p68 = scmp.ne.s32.totalorder %s54, %s55
      %p69 = scmp.eq.s32.totalorder %s26, 7
      %p70 = por %p68, %p69
      %p72 = scmp.ne.s32.totalorder %s55, %s71
      %p73 = scmp.eq.s32.totalorder %s26, 0
      %p74 = por %p72, %p73
      %s75 = ssub.s32 %s27, %s46
      %p76 = scmp.eq.s32.totalorder %s75, 0
      %s78 = sadd.s32 %s77, 1
      %s79 = scalar_select %p76, %s77, %s78
      %p82 = pneg %p76
      %p83 = scmp.eq.s32.totalorder %s20, 7
      %p84 = por %p82, %p83
      %p85 = scmp.ne.s32.totalorder %s77, %s80
      %p86 = scmp.eq.s32.totalorder %s20, 0
      %p87 = por %p85, %p86
      %p88 = scmp.ne.s32.totalorder %s77, %s80
      %p89 = scmp.eq.s32.totalorder %s25, 7
      %p90 = por %p88, %p89
      %p91 = scmp.ne.s32.totalorder %s80, %s81
      %p92 = scmp.eq.s32.totalorder %s25, 0
      %p93 = por %p91, %p92
      %p94 = scmp.ne.s32.totalorder %s80, %s81
      %p95 = scmp.eq.s32.totalorder %s26, 7
      %p96 = por %p94, %p95
      %p98 = scmp.ne.s32.totalorder %s81, %s97
      %p99 = scmp.eq.s32.totalorder %s26, 0
      %p100 = por %p98, %p99
      %s101 = ssub.s32 %s27, %s46
      %p102 = scmp.eq.s32.totalorder %s101, 0
      %s104 = sadd.s32 %s103, 1
      %s105 = scalar_select %p102, %s103, %s104
      %p108 = pneg %p102
      %p109 = scmp.eq.s32.totalorder %s20, 7
      %p110 = por %p108, %p109
      %p111 = scmp.ne.s32.totalorder %s103, %s106
      %p112 = scmp.eq.s32.totalorder %s20, 0
      %p113 = por %p111, %p112
      %p114 = scmp.ne.s32.totalorder %s103, %s106
      %p115 = scmp.eq.s32.totalorder %s25, 7
      %p116 = por %p114, %p115
      %p117 = scmp.ne.s32.totalorder %s106, %s107
      %p118 = scmp.eq.s32.totalorder %s25, 0
      %p119 = por %p117, %p118
      %p120 = scmp.ne.s32.totalorder %s106, %s107
      %p121 = scmp.eq.s32.totalorder %s26, 7
      %p122 = por %p120, %p121
      %p124 = scmp.ne.s32.totalorder %s107, %s123
      %p125 = scmp.eq.s32.totalorder %s26, 0
      %p126 = por %p124, %p125
      %s128 = sadd.s32 %s127, 1
      %p131 = scmp.eq.s32.totalorder %s20, 7
      %p132 = scmp.ne.s32.totalorder %s127, %s129
      %p133 = scmp.eq.s32.totalorder %s20, 0
      %p134 = por %p132, %p133
      %p135 = scmp.ne.s32.totalorder %s127, %s129
      %p136 = scmp.eq.s32.totalorder %s25, 7
      %p137 = por %p135, %p136
      %p138 = scmp.ne.s32.totalorder %s129, %s130
      %p139 = scmp.eq.s32.totalorder %s25, 0
      %p140 = por %p138, %p139
      %p141 = scmp.ne.s32.totalorder %s129, %s130
      %p142 = scmp.eq.s32.totalorder %s26, 7
      %p143 = por %p141, %p142
      %p145 = scmp.ne.s32.totalorder %s130, %s144
      %p146 = scmp.eq.s32.totalorder %s26, 0
      %p147 = por %p145, %p146
      %s149 = sadd.s32 %s148, 1
      %p152 = scmp.eq.s32.totalorder %s20, 7
      %p153 = scmp.ne.s32.totalorder %s148, %s150
      %p154 = scmp.eq.s32.totalorder %s20, 0
      %p155 = por %p153, %p154
      %p156 = scmp.ne.s32.totalorder %s148, %s150
      %p157 = scmp.eq.s32.totalorder %s25, 7
      %p158 = por %p156, %p157
      %p159 = scmp.ne.s32.totalorder %s150, %s151
      %p160 = scmp.eq.s32.totalorder %s25, 0
      %p161 = por %p159, %p160
      %p162 = scmp.ne.s32.totalorder %s150, %s151
      %p163 = scmp.eq.s32.totalorder %s26, 7
      %p164 = por %p162, %p163
      %p166 = scmp.ne.s32.totalorder %s151, %s165
      %p167 = scmp.eq.s32.totalorder %s26, 0
      %p168 = por %p166, %p167
      %s170 = sadd.s32 %s169, 1
      %p173 = scmp.eq.s32.totalorder %s20, 7
      %p174 = scmp.ne.s32.totalorder %s169, %s171
      %p175 = scmp.eq.s32.totalorder %s20, 0
      %p176 = por %p174, %p175
      %p177 = scmp.ne.s32.totalorder %s169, %s171
      %p178 = scmp.eq.s32.totalorder %s25, 7
      %p179 = por %p177, %p178
      %p180 = scmp.ne.s32.totalorder %s171, %s172
      %p181 = scmp.eq.s32.totalorder %s25, 0
      %p182 = por %p180, %p181
      %p183 = scmp.ne.s32.totalorder %s171, %s172
      %p184 = scmp.eq.s32.totalorder %s26, 7
      %p185 = por %p183, %p184
      %p187 = scmp.ne.s32.totalorder %s172, %s186
      %p188 = scmp.eq.s32.totalorder %s26, 0
      %p189 = por %p187, %p188
      %s191 = sadd.s32 %s190, 1
      %p194 = scmp.eq.s32.totalorder %s20, 7
      %p195 = scmp.ne.s32.totalorder %s190, %s192
      %p196 = scmp.eq.s32.totalorder %s20, 0
      %p197 = por %p195, %p196
      %p198 = scmp.ne.s32.totalorder %s190, %s192
      %p199 = scmp.eq.s32.totalorder %s25, 7
      %p200 = por %p198, %p199
      %p201 = scmp.ne.s32.totalorder %s192, %s193
      %p202 = scmp.eq.s32.totalorder %s25, 0
      %p203 = por %p201, %p202
      %p204 = scmp.ne.s32.totalorder %s192, %s193
      %p205 = scmp.eq.s32.totalorder %s26, 7
      %p206 = por %p204, %p205
      %p208 = scmp.ne.s32.totalorder %s193, %s207
      %p209 = scmp.eq.s32.totalorder %s26, 0
      %p210 = por %p208, %p209
      %s212 = sadd.s32 %s211, 1
      %p215 = scmp.eq.s32.totalorder %s20, 7
      %p216 = scmp.ne.s32.totalorder %s211, %s213
      %p217 = scmp.eq.s32.totalorder %s20, 0
      %p218 = por %p216, %p217
      %p219 = scmp.ne.s32.totalorder %s211, %s213
      %p220 = scmp.eq.s32.totalorder %s25, 7
      %p221 = por %p219, %p220
      %p222 = scmp.ne.s32.totalorder %s213, %s214
      %p223 = scmp.eq.s32.totalorder %s25, 0
      %p224 = por %p222, %p223
      %p225 = scmp.ne.s32.totalorder %s213, %s214
      %p226 = scmp.eq.s32.totalorder %s26, 7
      %p227 = por %p225, %p226
      %p229 = scmp.ne.s32.totalorder %s214, %s228
      %p230 = scmp.eq.s32.totalorder %s26, 0
      %p231 = por %p229, %p230
      %s233 = sadd.s32 %s232, 1
      %p236 = scmp.eq.s32.totalorder %s20, 7
      %p237 = scmp.ne.s32.totalorder %s232, %s234
      %p238 = scmp.eq.s32.totalorder %s20, 0
      %p239 = por %p237, %p238
      %p240 = scmp.ne.s32.totalorder %s232, %s234
      %p241 = scmp.eq.s32.totalorder %s25, 7
      %p242 = por %p240, %p241
      %p243 = scmp.ne.s32.totalorder %s234, %s235
      %p244 = scmp.eq.s32.totalorder %s25, 0
      %p245 = por %p243, %p244
      %p246 = scmp.ne.s32.totalorder %s234, %s235
      %p247 = scmp.eq.s32.totalorder %s26, 7
      %p248 = por %p246, %p247
      %p250 = scmp.ne.s32.totalorder %s235, %s249
      %p251 = scmp.eq.s32.totalorder %s26, 0
      %p252 = por %p250, %p251
      %s254 = sadd.s32 %s253, 1
      %p257 = scmp.eq.s32.totalorder %s20, 7
      %p258 = scmp.ne.s32.totalorder %s253, %s255
      %p259 = scmp.eq.s32.totalorder %s20, 0
      %p260 = por %p258, %p259
      %p261 = scmp.ne.s32.totalorder %s253, %s255
      %p262 = scmp.eq.s32.totalorder %s25, 7
      %p263 = por %p261, %p262
      %p264 = scmp.ne.s32.totalorder %s255, %s256
      %p265 = scmp.eq.s32.totalorder %s25, 0
      %p266 = por %p264, %p265
      %p267 = scmp.ne.s32.totalorder %s255, %s256
      %p268 = scmp.eq.s32.totalorder %s26, 7
      %p269 = por %p267, %p268
      %p271 = scmp.ne.s32.totalorder %s256, %s270
      %p272 = scmp.eq.s32.totalorder %s26, 0
      %p273 = por %p271, %p272
      %s275 = sadd.s32 %s274, 1
      %p278 = scmp.eq.s32.totalorder %s20, 7
      %p279 = scmp.ne.s32.totalorder %s274, %s276
      %p280 = scmp.eq.s32.totalorder %s20, 0
      %p281 = por %p279, %p280
      %p282 = scmp.ne.s32.totalorder %s274, %s276
      %p283 = scmp.eq.s32.totalorder %s25, 7
      %p284 = por %p282, %p283
      %p285 = scmp.ne.s32.totalorder %s276, %s277
      %p286 = scmp.eq.s32.totalorder %s25, 0
      %p287 = por %p285, %p286
      %p288 = scmp.ne.s32.totalorder %s276, %s277
      %p289 = scmp.eq.s32.totalorder %s26, 7
      %p290 = por %p288, %p289
      %p292 = scmp.ne.s32.totalorder %s277, %s291
      %p293 = scmp.eq.s32.totalorder %s26, 0
      %p294 = por %p292, %p293
      %s295 = ssub.s32 %s27, %s46
      %s296 = ssub.s32 %s28, %s42
      %s297 = sor.u32 %s295, %s296
      %p298 = scmp.eq.s32.totalorder %s297, 0
      %s300 = sadd.s32 %s299, 1
      %s301 = scalar_select %p298, %s299, %s300
      %p304 = pneg %p298
      %p305 = scmp.eq.s32.totalorder %s20, 7
      %p306 = por %p304, %p305
      %p307 = scmp.ne.s32.totalorder %s299, %s302
      %p308 = scmp.eq.s32.totalorder %s20, 0
      %p309 = por %p307, %p308
      %p310 = scmp.ne.s32.totalorder %s299, %s302
      %p311 = scmp.eq.s32.totalorder %s25, 7
      %p312 = por %p310, %p311
      %p313 = scmp.ne.s32.totalorder %s302, %s303
      %p314 = scmp.eq.s32.totalorder %s25, 0
      %p315 = por %p313, %p314
      %p316 = scmp.ne.s32.totalorder %s302, %s303
      %p317 = scmp.eq.s32.totalorder %s26, 7
      %p318 = por %p316, %p317
      %p320 = scmp.ne.s32.totalorder %s303, %s319
      %p321 = scmp.eq.s32.totalorder %s26, 0
      %p322 = por %p320, %p321
      %p323 = scmp.le.s32.totalorder 1, %s20
      %p324 = scmp.lt.s32.totalorder %s20, 9
      %p325 = pnand %p323, %p324
      %p326 = pneg %p325
      // Predicated region
      $region9: #{tpu_custom_call.1} parent=5 // pred_check
        _
      $region10: #{tpu_custom_call.1} parent=5 // pred_check_branch
        %328 = sbr.rel (%p325) target = $region12
      $region11: #{tpu_custom_call.1} parent=5 // pred_region
        %s329 = ssub.s32 %s20, 1
        // Predicated region
        $region13: #{tpu_custom_call.1} parent=11 // pred_check
          %p330 = pneg %p140
        $region14: #{tpu_custom_call.1} parent=11 // pred_check_branch
          %332 = sbr.rel (%p330) target = $region16
        $region15: #{tpu_custom_call.1} parent=11 // pred_region
          _
        $region16: #{tpu_custom_call.1} parent=11 // pred_fallthru
          _
        // Predicated region
        $region17: #{tpu_custom_call.1} parent=11 // pred_check
          %p333 = pneg %p161
        $region18: #{tpu_custom_call.1} parent=11 // pred_check_branch
          %335 = sbr.rel (%p333) target = $region20
        $region19: #{tpu_custom_call.1} parent=11 // pred_region
          _
        $region20: #{tpu_custom_call.1} parent=11 // pred_fallthru
          _
        // Predicated region
        $region21: #{tpu_custom_call.1} parent=11 // pred_check
          %p336 = pneg %p182
        $region22: #{tpu_custom_call.1} parent=11 // pred_check_branch
          %338 = sbr.rel (%p336) target = $region24
        $region23: #{tpu_custom_call.1} parent=11 // pred_region
          _
        $region24: #{tpu_custom_call.1} parent=11 // pred_fallthru
          _
        // Predicated region
        $region25: #{tpu_custom_call.1} parent=11 // pred_check
          %p339 = pneg %p203
        $region26: #{tpu_custom_call.1} parent=11 // pred_check_branch
          %341 = sbr.rel (%p339) target = $region28
        $region27: #{tpu_custom_call.1} parent=11 // pred_region
          _
        $region28: #{tpu_custom_call.1} parent=11 // pred_fallthru
          _
        // Predicated region
        $region29: #{tpu_custom_call.1} parent=11 // pred_check
          %p342 = pneg %p224
        $region30: #{tpu_custom_call.1} parent=11 // pred_check_branch
          %344 = sbr.rel (%p342) target = $region32
        $region31: #{tpu_custom_call.1} parent=11 // pred_region
          _
        $region32: #{tpu_custom_call.1} parent=11 // pred_fallthru
          _
        // Predicated region
        $region33: #{tpu_custom_call.1} parent=11 // pred_check
          %p345 = pneg %p245
        $region34: #{tpu_custom_call.1} parent=11 // pred_check_branch
          %347 = sbr.rel (%p345) target = $region36
        $region35: #{tpu_custom_call.1} parent=11 // pred_region
          _
        $region36: #{tpu_custom_call.1} parent=11 // pred_fallthru
          _
        // Predicated region
        $region37: #{tpu_custom_call.1} parent=11 // pred_check
          %p348 = pneg %p266
        $region38: #{tpu_custom_call.1} parent=11 // pred_check_branch
          %350 = sbr.rel (%p348) target = $region40
        $region39: #{tpu_custom_call.1} parent=11 // pred_region
          _
        $region40: #{tpu_custom_call.1} parent=11 // pred_fallthru
          _
        // Predicated region
        $region41: #{tpu_custom_call.1} parent=11 // pred_check
          %p351 = pneg %p287
        $region42: #{tpu_custom_call.1} parent=11 // pred_check_branch
          %353 = sbr.rel (%p351) target = $region44
        $region43: #{tpu_custom_call.1} parent=11 // pred_region
          _
        $region44: #{tpu_custom_call.1} parent=11 // pred_fallthru
          _
      $region12: #{tpu_custom_call.1} parent=5 // pred_fallthru
        _
      %p354 = scmp.lt.s32.totalorder %s20, 8
      // Predicated region
      $region45: #{tpu_custom_call.1} parent=5 // pred_check
        %p355 = pneg %p354
      $region46: #{tpu_custom_call.1} parent=5 // pred_check_branch
        %357 = sbr.rel (%p355) target = $region48
      $region47: #{tpu_custom_call.1} parent=5 // pred_region
        // Predicated region
        $region49: #{tpu_custom_call.1} parent=47 // pred_check
          %p358 = pneg %p61
        $region50: #{tpu_custom_call.1} parent=47 // pred_check_branch
          %360 = sbr.rel (%p358) target = $region52
        $region51: #{tpu_custom_call.1} parent=47 // pred_region
          %p361 = scmp.lt.s32.totalorder %s27, 1
          %s362 = scalar_select %p361, %s27, 1
          %p363 = scmp.lt.s32.totalorder %s28, 0
          %s364 = scalar_select %p363, %s28, 0
          %s365 = sadd.s32 %s364, %s362
          %s366 = smul.addr %s365, 4
          %s367 = scalar_lea.vmem %s0, %s366
        $region52: #{tpu_custom_call.1} parent=47 // pred_fallthru
          _
        // Predicated region
        $region53: #{tpu_custom_call.1} parent=47 // pred_check
          %p368 = pneg %p87
        $region54: #{tpu_custom_call.1} parent=47 // pred_check_branch
          %370 = sbr.rel (%p368) target = $region56
        $region55: #{tpu_custom_call.1} parent=47 // pred_region
          %p371 = scmp.lt.s32.totalorder %s27, 1
          %s372 = scalar_select %p371, %s27, 1
          %s373 = smul.addr %s372, 4
          %s374 = scalar_lea.vmem %s1, %s373
        $region56: #{tpu_custom_call.1} parent=47 // pred_fallthru
          _
        // Predicated region
        $region57: #{tpu_custom_call.1} parent=47 // pred_check
          %p375 = pneg %p113
        $region58: #{tpu_custom_call.1} parent=47 // pred_check_branch
          %377 = sbr.rel (%p375) target = $region60
        $region59: #{tpu_custom_call.1} parent=47 // pred_region
          %p378 = scmp.lt.s32.totalorder %s27, 1
          %s379 = scalar_select %p378, %s27, 1
          %s380 = smul.addr %s379, 4
          %s381 = scalar_lea.vmem %s2, %s380
        $region60: #{tpu_custom_call.1} parent=47 // pred_fallthru
          _
      $region48: #{tpu_custom_call.1} parent=5 // pred_fallthru
        _
      %p382 = scmp.le.s32.totalorder 1, %s20
      %p383 = scmp.lt.s32.totalorder %s20, 9
      %p384 = pnand %p382, %p383
      %p385 = pneg %p384
      // Predicated region
      $region61: #{tpu_custom_call.1} parent=5 // pred_check
        _
      $region62: #{tpu_custom_call.1} parent=5 // pred_check_branch
        %387 = sbr.rel (%p384) target = $region64
      $region63: #{tpu_custom_call.1} parent=5 // pred_region
        %s388 = ssub.s32 %s20, 1
        %p389 = scmp.lt.s32.totalorder %s30, 1
        %s390 = scalar_select %p389, %s30, 1
        %p391 = scmp.lt.s32.totalorder %s31, 0
        %s392 = scalar_select %p391, %s31, 0
        %s393 = sadd.s32 %s392, %s390
        %s394 = smul.addr %s393, 4
        %s395 = scalar_lea.vmem %s0, %s394
        %p396 = pneg %p67
        %p397 = pneg %p64
        %p398 = scmp.lt.s32.totalorder %s30, 1
        %s399 = scalar_select %p398, %s30, 1
        %s400 = smul.addr %s399, 4
        %s401 = scalar_lea.vmem %s1, %s400
        %p402 = pneg %p93
        %p403 = pneg %p90
        %p404 = scmp.lt.s32.totalorder %s30, 1
        %s405 = scalar_select %p404, %s30, 1
        %s406 = smul.addr %s405, 4
        %s407 = scalar_lea.vmem %s2, %s406
        %p408 = pneg %p119
        %p409 = pneg %p116
        %p410 = pneg %p140
        %p411 = pneg %p137
        %p412 = pneg %p161
        %p413 = pneg %p158
        %p414 = pneg %p182
        %p415 = pneg %p179
        %p416 = pneg %p203
        %p417 = pneg %p200
        %p418 = pneg %p224
        %p419 = pneg %p221
        %p420 = pneg %p245
        %p421 = pneg %p242
        %p422 = pneg %p266
        %p423 = pneg %p263
        %p424 = pneg %p287
        %p425 = pneg %p284
        %p426 = pneg %p315
        %p427 = pneg %p312
        %s428 = sand.u32 %s302, 1
        %s429 = scalar_lea.sflag [#allocation6], %s428
        %s430 = sand.u32 %s302, 1
        %s431 = smul.addr %s430, 8
        %s432 = scalar_lea.vmem [#allocation5], %s431
        %p433 = scmp.lt.s32.totalorder %s30, 1
        %s434 = scalar_select %p433, %s30, 1
        %p435 = scmp.lt.s32.totalorder %s31, 0
        %s436 = scalar_select %p435, %s31, 0
        %s437 = sadd.s32 %s436, %s434
        %s438 = smul.addr %s437, 4
        %s439 = scalar_lea.vmem %s0, %s438
        %p440 = scmp.lt.s32.totalorder %s30, 1
        %s441 = scalar_select %p440, %s30, 1
        %s442 = smul.addr %s441, 4
        %s443 = scalar_lea.vmem %s1, %s442
        %p444 = scmp.lt.s32.totalorder %s30, 1
        %s445 = scalar_select %p444, %s30, 1
        %s446 = smul.addr %s445, 4
        %s447 = scalar_lea.vmem %s2, %s446
        %p449 = scmp.eq.s32.totalorder %s32, 0
        // Predicated region
        $region65: #{tpu_custom_call.1} parent=63 // pred_check
          %p450 = pneg %p449
        $region66: #{tpu_custom_call.1} parent=63 // pred_check_branch
          %452 = sbr.rel (%p450) target = $region68
        $region67: #{tpu_custom_call.1} parent=63 // pred_region
          %v453 = vld [vmem:[%s10] sm:$0x1]
          %v455 = vlaneseq
          %v456 = vshrl.u32 %v455, 7
          %v457 = vsub.s32 0, %v456
          %v458 = vrot.slane %v453, %v457
          %vm460 = vcmask 261120
          %461 = vst.msk [vmem:[#allocation4] sm:$0xff] %vm460, %v458
        $region68: #{tpu_custom_call.1} parent=63 // pred_fallthru
          _
        %p462 = scmp.eq.s32.totalorder %s31, 0
        // Predicated region
        $region69: #{tpu_custom_call.1} parent=63 // pred_check
          %p463 = pneg %p462
        $region70: #{tpu_custom_call.1} parent=63 // pred_check_branch
          %465 = sbr.rel (%p463) target = $region72
        $region71: #{tpu_custom_call.1} parent=63 // pred_region
          %v466 = vld [vmem:[%s443] sm:$0xf]
          %v467 = vld [vmem:[%s447] sm:$0xf]
          %s468 = smul.u32 %s32, 4
          %s469 = smul.addr %s468, 4
          %s470 = scalar_lea.vmem %s5, %s469
          %v471 = vld [vmem:[%s470] sm:$0xf]
          %v472 = vld [vmem:[%s470 + $0x4] sm:$0xf]
          %v473 = vld [vmem:[%s470 + $0x8] sm:$0xf]
          %v474 = vld [vmem:[%s470 + $0xc] sm:$0xf]
          %s475 = scalar_lea.vmem %s6, %s32
          %v476 = vld [vmem:[%s475] sm:$0x1]
          %v478 = vlaneseq
          %v479 = vshrl.u32 %v478, 7
          %v480 = vsub.s32 0, %v479
          %v481 = vrot.slane %v476, %v480
          %v487 = vunpack.c.l.b16 %v471
          %v488 = vunpack.c.l.b16 %v472
          %v489 = vunpack.c.l.b16 %v473
          %v490 = vunpack.c.l.b16 %v474
          %v491 = vpack.c.b16 %v488, %v487
          %v492 = vpack.c.b16 %v490, %v489
          %vm495 = vcmask 261120
          %v497 = vsel %vm495, %v466, 0
          %499 = vmatprep.subr.bf16.mxu0 0
          %500 = vmatpush1.bf16.msra.mxu0 0
          %501 = vmatprep.subr.bf16.mxu0 0
          %502 = vmatpush1.bf16.msra.mxu0 0
          %503 = vmatprep.subr.bf16.mxu0 0
          %504 = vmatpush1.bf16.msra.mxu0 0
          %505 = vmatprep.subr.bf16.mxu0 0
          %506 = vmatpush1.bf16.msra.mxu0 0
          %507 = vmatprep.subr.bf16.mxu0 0
          %508 = vmatpush1.bf16.msra.mxu0 0
          %509 = vmatprep.subr.bf16.mxu0 0
          %510 = vmatpush1.bf16.msra.mxu0 0
          %511 = vmatprep.subr.bf16.mxu0 0
          %512 = vmatpush1.bf16.msra.mxu0 %v492
          %513 = vmatprep.subr.bf16.mxu0 0
          %514 = vmatpush1.bf16.msra.mxu0 %v491
          %515 = vmatprep.subr.bf16.mxu0 0
          %516 = vmatpush2.bf16.msra.mxu0 0
          %517 = vmatprep.subr.bf16.mxu0 0
          %518 = vmatpush2.bf16.msra.mxu0 0
          %519 = vmatprep.subr.bf16.mxu0 0
          %520 = vmatpush2.bf16.msra.mxu0 0
          %521 = vmatprep.subr.bf16.mxu0 0
          %522 = vmatpush2.bf16.msra.mxu0 0
          %523 = vmatprep.subr.bf16.mxu0 0
          %524 = vmatpush2.bf16.msra.mxu0 0
          %525 = vmatprep.subr.bf16.mxu0 0
          %526 = vmatpush2.bf16.msra.mxu0 0
          %527 = vmatprep.subr.bf16.mxu0 0
          %528 = vmatpush2.bf16.msra.mxu0 0
          %529 = vmatprep.subr.bf16.mxu0 0
          %530 = vmatpush2.bf16.msra.mxu0 0
          %531 = vmatprep.mubr.bf16.mxu0 0
          %532 = vmatmul.mubr.bf16.gmra.mxu0 %v497
          %v533 = vpop.f32.mrf.mxu0
          %v534 = vadd.f32 %v481, %v533
          %v535 = vpop.f32.mrf.mxu0
          %v536 = vpop.f32.mrf.mxu0
          %v537 = vpop.f32.mrf.mxu0
          %538 = vdwg.mxu0
          %s539 = smul.addr %s468, 4
          %s540 = scalar_lea.vmem %s7, %s539
          %v541 = vld [vmem:[%s540] sm:$0xf]
          %v542 = vld [vmem:[%s540 + $0x4] sm:$0xf]
          %v543 = vld [vmem:[%s540 + $0x8] sm:$0xf]
          %v544 = vld [vmem:[%s540 + $0xc] sm:$0xf]
          %s545 = scalar_lea.vmem %s8, %s32
          %v546 = vld [vmem:[%s545] sm:$0x1]
          %v548 = vlaneseq
          %v549 = vshrl.u32 %v548, 7
          %v550 = vsub.s32 0, %v549
          %v551 = vrot.slane %v546, %v550
          %v557 = vunpack.c.l.b16 %v541
          %v558 = vunpack.c.l.b16 %v542
          %v559 = vunpack.c.l.b16 %v543
          %v560 = vunpack.c.l.b16 %v544
          %v561 = vpack.c.b16 %v558, %v557
          %v562 = vpack.c.b16 %v560, %v559
          %v566 = vsel %vm495, %v467, 0
          %568 = vmatprep.subr.bf16.mxu0 0
          %569 = vmatpush1.bf16.msra.mxu0 0
          %570 = vmatprep.subr.bf16.mxu0 0
          %571 = vmatpush1.bf16.msra.mxu0 0
          %572 = vmatprep.subr.bf16.mxu0 0
          %573 = vmatpush1.bf16.msra.mxu0 0
          %574 = vmatprep.subr.bf16.mxu0 0
          %575 = vmatpush1.bf16.msra.mxu0 0
          %576 = vmatprep.subr.bf16.mxu0 0
          %577 = vmatpush1.bf16.msra.mxu0 0
          %578 = vmatprep.subr.bf16.mxu0 0
          %579 = vmatpush1.bf16.msra.mxu0 0
          %580 = vmatprep.subr.bf16.mxu0 0
          %581 = vmatpush1.bf16.msra.mxu0 %v562
          %582 = vmatprep.subr.bf16.mxu0 0
          %583 = vmatpush1.bf16.msra.mxu0 %v561
          %584 = vmatprep.subr.bf16.mxu0 0
          %585 = vmatpush2.bf16.msra.mxu0 0
          %586 = vmatprep.subr.bf16.mxu0 0
          %587 = vmatpush2.bf16.msra.mxu0 0
          %588 = vmatprep.subr.bf16.mxu0 0
          %589 = vmatpush2.bf16.msra.mxu0 0
          %590 = vmatprep.subr.bf16.mxu0 0
          %591 = vmatpush2.bf16.msra.mxu0 0
          %592 = vmatprep.subr.bf16.mxu0 0
          %593 = vmatpush2.bf16.msra.mxu0 0
          %594 = vmatprep.subr.bf16.mxu0 0
          %595 = vmatpush2.bf16.msra.mxu0 0
          %596 = vmatprep.subr.bf16.mxu0 0
          %597 = vmatpush2.bf16.msra.mxu0 0
          %598 = vmatprep.subr.bf16.mxu0 0
          %599 = vmatpush2.bf16.msra.mxu0 0
          %600 = vmatprep.mubr.bf16.mxu0 0
          %601 = vmatmul.mubr.bf16.gmra.mxu0 %v566
          %v602 = vpop.f32.mrf.mxu0
          %v603 = vadd.f32 %v551, %v602
          %v604 = vpop.f32.mrf.mxu0
          %v605 = vpop.f32.mrf.mxu0
          %v606 = vpop.f32.mrf.mxu0
          %607 = vdwg.mxu0
          %v608 = vpack.c.bf16 %v534, %v534
          %s609 = smul.addr %s32, 4
          %s610 = scalar_lea.vmem [#allocation2], %s609
          %vm611 = vcmask 60416
          %612 = vst.msk [vmem:[%s610] sm:$0xf] %vm611, %v608
          %v613 = vpack.c.bf16 %v603, %v603
          %s614 = smul.addr %s32, 4
          %s615 = scalar_lea.vmem [#allocation3], %s614
          %616 = vst.msk [vmem:[%s615] sm:$0xf] %vm611, %v613
        $region72: #{tpu_custom_call.1} parent=63 // pred_fallthru
          _
        %v617 = vld [vmem:[%s439] sm:$0xf]
        %s618 = smul.u32 %s32, 4
        %s619 = smul.addr %s618, 4
        %s620 = scalar_lea.vmem %s3, %s619
        %v621 = vld [vmem:[%s620] sm:$0xf]
        %v622 = vld [vmem:[%s620 + $0x4] sm:$0xf]
        %v623 = vld [vmem:[%s620 + $0x8] sm:$0xf]
        %v624 = vld [vmem:[%s620 + $0xc] sm:$0xf]
        %s625 = scalar_lea.vmem %s4, %s32
        %v626 = vld [vmem:[%s625] sm:$0x1]
        %v628 = vlaneseq
        %v629 = vshrl.u32 %v628, 7
        %v630 = vsub.s32 0, %v629
        %v631 = vrot.slane %v626, %v630
        %v637 = vunpack.c.l.b16 %v621
        %v638 = vunpack.c.l.b16 %v622
        %v639 = vunpack.c.l.b16 %v623
        %v640 = vunpack.c.l.b16 %v624
        %v641 = vpack.c.b16 %v638, %v637
        %v642 = vpack.c.b16 %v640, %v639
        %vm645 = vcmask 261120
        %v647 = vsel %vm645, %v617, 0
        %649 = vmatprep.subr.bf16.mxu0 0
        %650 = vmatpush1.bf16.msra.mxu0 0
        %651 = vmatprep.subr.bf16.mxu0 0
        %652 = vmatpush1.bf16.msra.mxu0 0
        %653 = vmatprep.subr.bf16.mxu0 0
        %654 = vmatpush1.bf16.msra.mxu0 0
        %655 = vmatprep.subr.bf16.mxu0 0
        %656 = vmatpush1.bf16.msra.mxu0 0
        %657 = vmatprep.subr.bf16.mxu0 0
        %658 = vmatpush1.bf16.msra.mxu0 0
        %659 = vmatprep.subr.bf16.mxu0 0
        %660 = vmatpush1.bf16.msra.mxu0 0
        %661 = vmatprep.subr.bf16.mxu0 0
        %662 = vmatpush1.bf16.msra.mxu0 %v642
        %663 = vmatprep.subr.bf16.mxu0 0
        %664 = vmatpush1.bf16.msra.mxu0 %v641
        %665 = vmatprep.subr.bf16.mxu0 0
        %666 = vmatpush2.bf16.msra.mxu0 0
        %667 = vmatprep.subr.bf16.mxu0 0
        %668 = vmatpush2.bf16.msra.mxu0 0
        %669 = vmatprep.subr.bf16.mxu0 0
        %670 = vmatpush2.bf16.msra.mxu0 0
        %671 = vmatprep.subr.bf16.mxu0 0
        %672 = vmatpush2.bf16.msra.mxu0 0
        %673 = vmatprep.subr.bf16.mxu0 0
        %674 = vmatpush2.bf16.msra.mxu0 0
        %675 = vmatprep.subr.bf16.mxu0 0
        %676 = vmatpush2.bf16.msra.mxu0 0
        %677 = vmatprep.subr.bf16.mxu0 0
        %678 = vmatpush2.bf16.msra.mxu0 0
        %679 = vmatprep.subr.bf16.mxu0 0
        %680 = vmatpush2.bf16.msra.mxu0 0
        %681 = vmatprep.mubr.bf16.mxu0 0
        %682 = vmatmul.mubr.bf16.gmra.mxu0 %v647
        %v683 = vpop.f32.mrf.mxu0
        %v684 = vadd.f32 %v631, %v683
        %v685 = vpop.f32.mrf.mxu0
        %v686 = vpop.f32.mrf.mxu0
        %v687 = vpop.f32.mrf.mxu0
        %688 = vdwg.mxu0
        %v689 = vmul.f32 %v684, 0.35355338
        %s690 = smul.addr %s32, 4
        %s691 = scalar_lea.vmem [#allocation2], %s690
        %v692 = vld [vmem:[%s691] sm:$0xf]
        %s693 = smul.addr %s32, 4
        %s694 = scalar_lea.vmem [#allocation3], %s693
        %v695 = vld [vmem:[%s694] sm:$0xf]
        %v696 = vpack.c.bf16 %v689, %v689
        %vm697 = vcmask 64512
        %v699 = vsel %vm697, %v696, 0
        %v702 = vsel %vm697, %v692, 0
        %704 = vmatprep.subr.bf16.mxu0 0
        %705 = vmatpush1.bf16.xpose.msra.mxu0 0
        %706 = vmatprep.subr.bf16.mxu0 0
        %707 = vmatpush1.bf16.xpose.msra.mxu0 0
        %708 = vmatprep.subr.bf16.mxu0 0
        %709 = vmatpush1.bf16.xpose.msra.mxu0 0
        %710 = vmatprep.subr.bf16.mxu0 0
        %711 = vmatpush1.bf16.xpose.msra.mxu0 0
        %712 = vmatprep.subr.bf16.mxu0 0
        %713 = vmatpush1.bf16.xpose.msra.mxu0 0
        %714 = vmatprep.subr.bf16.mxu0 0
        %715 = vmatpush1.bf16.xpose.msra.mxu0 0
        %716 = vmatprep.subr.bf16.mxu0 0
        %717 = vmatpush1.bf16.xpose.msra.mxu0 0
        %718 = vmatprep.subr.bf16.mxu0 0
        %719 = vmatpush1.bf16.xpose.msra.mxu0 %v702
        %720 = vmatprep.subr.bf16.mxu0 0
        %721 = vmatpush2.bf16.xpose.msra.mxu0 0
        %722 = vmatprep.subr.bf16.mxu0 0
        %723 = vmatpush2.bf16.xpose.msra.mxu0 0
        %724 = vmatprep.subr.bf16.mxu0 0
        %725 = vmatpush2.bf16.xpose.msra.mxu0 0
        %726 = vmatprep.subr.bf16.mxu0 0
        %727 = vmatpush2.bf16.xpose.msra.mxu0 0
        %728 = vmatprep.subr.bf16.mxu0 0
        %729 = vmatpush2.bf16.xpose.msra.mxu0 0
        %730 = vmatprep.subr.bf16.mxu0 0
        %731 = vmatpush2.bf16.xpose.msra.mxu0 0
        %732 = vmatprep.subr.bf16.mxu0 0
        %733 = vmatpush2.bf16.xpose.msra.mxu0 0
        %734 = vmatprep.subr.bf16.mxu0 0
        %735 = vmatpush2.bf16.xpose.msra.mxu0 0
        %736 = vmatprep.mubr.bf16.mxu0 0
        %737 = vmatmul.mubr.bf16.gmra.mxu0 %v699
        %v738 = vpop.f32.mrf.mxu0
        %v739 = vadd.f32 0.0, %v738
        %v740 = vpop.f32.mrf.mxu0
        %v741 = vpop.f32.mrf.mxu0
        %v742 = vpop.f32.mrf.mxu0
        %743 = vdwg.mxu0
        %v744 = vsel %vm697, %v739, -inf
        %745 = vmax.xlane.f32.xlu0 %v744
        %v746 = vpop.xlane.xlu0 %745
        %v747 = vsub.f32 %v739, %v746
        %v748 = vmul.f32 %v747, 1.442695
        %v749 = vpow.pop %v748
        %v750 = vsel %vm697, %v749, 0.0
        %751 = vadd.xlane.f32.xlu0 %v750
        %v752 = vpop.xlane.xlu0 %751
        %v753 = vpack.c.bf16 %v749, %v749
        %v755 = vsel %vm697, %v753, 0
        %vm757 = vcmask 1043456
        %v759 = vsel %vm757, %v695, 0
        %761 = vmatprep.subr.bf16.mxu0 0
        %762 = vmatpush1.bf16.msra.mxu0 0
        %763 = vmatprep.subr.bf16.mxu0 0
        %764 = vmatpush1.bf16.msra.mxu0 0
        %765 = vmatprep.subr.bf16.mxu0 0
        %766 = vmatpush1.bf16.msra.mxu0 0
        %767 = vmatprep.subr.bf16.mxu0 0
        %768 = vmatpush1.bf16.msra.mxu0 0
        %769 = vmatprep.subr.bf16.mxu0 0
        %770 = vmatpush1.bf16.msra.mxu0 0
        %771 = vmatprep.subr.bf16.mxu0 0
        %772 = vmatpush1.bf16.msra.mxu0 0
        %773 = vmatprep.subr.bf16.mxu0 0
        %774 = vmatpush1.bf16.msra.mxu0 0
        %775 = vmatprep.subr.bf16.mxu0 0
        %776 = vmatpush1.bf16.msra.mxu0 %v759
        %777 = vmatprep.subr.bf16.mxu0 0
        %778 = vmatpush2.bf16.msra.mxu0 0
        %779 = vmatprep.subr.bf16.mxu0 0
        %780 = vmatpush2.bf16.msra.mxu0 0
        %781 = vmatprep.subr.bf16.mxu0 0
        %782 = vmatpush2.bf16.msra.mxu0 0
        %783 = vmatprep.subr.bf16.mxu0 0
        %784 = vmatpush2.bf16.msra.mxu0 0
        %785 = vmatprep.subr.bf16.mxu0 0
        %786 = vmatpush2.bf16.msra.mxu0 0
        %787 = vmatprep.subr.bf16.mxu0 0
        %788 = vmatpush2.bf16.msra.mxu0 0
        %789 = vmatprep.subr.bf16.mxu0 0
        %790 = vmatpush2.bf16.msra.mxu0 0
        %791 = vmatprep.subr.bf16.mxu0 0
        %792 = vmatpush2.bf16.msra.mxu0 0
        %793 = vmatprep.mubr.bf16.mxu0 0
        %794 = vmatmul.mubr.bf16.gmra.mxu0 %v755
        %v795 = vpop.f32.mrf.mxu0
        %v796 = vadd.f32 0.0, %v795
        %v797 = vpop.f32.mrf.mxu0
        %v798 = vpop.f32.mrf.mxu0
        %v799 = vpop.f32.mrf.mxu0
        %800 = vdwg.mxu0
        %v801 = vrcp.pop %v752
        %v802 = vmul.f32 %v796, %v801
        %v803 = vld [vmem:[#allocation4] sm:$0xff]
        %v804 = vpack.c.bf16 %v802, %v802
        %s805 = smul.addr %s32, 4
        %s806 = scalar_lea.vmem %s9, %s805
        %v807 = vld [vmem:[%s806] sm:$0xf]
        %v809 = vsel %vm697, %v804, 0
        %v812 = vsel %vm757, %v807, 0
        %814 = vmatprep.subr.bf16.mxu0 0
        %815 = vmatpush1.bf16.msra.mxu0 0
        %816 = vmatprep.subr.bf16.mxu0 0
        %817 = vmatpush1.bf16.msra.mxu0 0
        %818 = vmatprep.subr.bf16.mxu0 0
        %819 = vmatpush1.bf16.msra.mxu0 0
        %820 = vmatprep.subr.bf16.mxu0 0
        %821 = vmatpush1.bf16.msra.mxu0 0
        %822 = vmatprep.subr.bf16.mxu0 0
        %823 = vmatpush1.bf16.msra.mxu0 0
        %824 = vmatprep.subr.bf16.mxu0 0
        %825 = vmatpush1.bf16.msra.mxu0 0
        %826 = vmatprep.subr.bf16.mxu0 0
        %827 = vmatpush1.bf16.msra.mxu0 0
        %828 = vmatprep.subr.bf16.mxu0 0
        %829 = vmatpush1.bf16.msra.mxu0 %v812
        %830 = vmatprep.subr.bf16.mxu0 0
        %831 = vmatpush2.bf16.msra.mxu0 0
        %832 = vmatprep.subr.bf16.mxu0 0
        %833 = vmatpush2.bf16.msra.mxu0 0
        %834 = vmatprep.subr.bf16.mxu0 0
        %835 = vmatpush2.bf16.msra.mxu0 0
        %836 = vmatprep.subr.bf16.mxu0 0
        %837 = vmatpush2.bf16.msra.mxu0 0
        %838 = vmatprep.subr.bf16.mxu0 0
        %839 = vmatpush2.bf16.msra.mxu0 0
        %840 = vmatprep.subr.bf16.mxu0 0
        %841 = vmatpush2.bf16.msra.mxu0 0
        %842 = vmatprep.subr.bf16.mxu0 0
        %843 = vmatpush2.bf16.msra.mxu0 0
        %844 = vmatprep.subr.bf16.mxu0 0
        %845 = vmatpush2.bf16.msra.mxu0 0
        %846 = vmatprep.mubr.bf16.mxu0 0
        %847 = vmatmul.mubr.bf16.gmra.mxu0 %v809
        %v848 = vpop.f32.mrf.mxu0
        %v849 = vadd.f32 0.0, %v848
        %v850 = vpop.f32.mrf.mxu0
        %v851 = vpop.f32.mrf.mxu0
        %v852 = vpop.f32.mrf.mxu0
        %853 = vdwg.mxu0
        %v854 = vadd.f32 %v803, %v849
        %855 = vst.msk [vmem:[#allocation4] sm:$0xff] %vm645, %v854
        %p856 = scmp.eq.s32.totalorder %s32, 3
        // Predicated region
        $region73: #{tpu_custom_call.1} parent=63 // pred_check
          %p857 = pneg %p856
        $region74: #{tpu_custom_call.1} parent=63 // pred_check_branch
          %859 = sbr.rel (%p857) target = $region76
        $region75: #{tpu_custom_call.1} parent=63 // pred_region
          %v860 = vld [vmem:[#allocation4] sm:$0xff]
          %861 = vst.msk [vmem:[%s432] sm:$0xff] %vm645, %v860
        $region76: #{tpu_custom_call.1} parent=63 // pred_fallthru
          _
        %s862 = sand.u32 %s302, 1
        %s863 = scalar_lea.sflag [#allocation6], %s862
        %s864 = sand.u32 %s302, 1
        %s865 = smul.addr %s864, 8
        %s866 = scalar_lea.vmem [#allocation5], %s865
        // Predicated region
        $region77: #{tpu_custom_call.1} parent=63 // pred_check
          %p867 = pneg %p312
        $region78: #{tpu_custom_call.1} parent=63 // pred_check_branch
          %869 = sbr.rel (%p867) target = $region80
        $region79: #{tpu_custom_call.1} parent=63 // pred_region
          %s871 = ssub.s32 128, 128
          %872 = vsyncadd %s863, %s871
          %s873 = sadd.s32 %s31, %s30
          %s874 = smul.addr %s873, 128
          %s875 = scalar_lea.hbm %s11, %s874
          %s877 = sshll.u32 %s866, 4
          %s878 = int_to_ptr.vmem [resolvable:$true] %s877
          %880 = dma.vmem_to_hbm [thread:$0]  %s878, 128, %s875, %s863
        $region80: #{tpu_custom_call.1} parent=63 // pred_fallthru
          _
      $region64: #{tpu_custom_call.1} parent=5 // pred_fallthru
        _
      %p881 = scmp.le.s32.totalorder 2, %s20
      // Predicated region
      $region81: #{tpu_custom_call.1} parent=5 // pred_check
        %p882 = pneg %p881
      $region82: #{tpu_custom_call.1} parent=5 // pred_check_branch
        %884 = sbr.rel (%p882) target = $region84
      $region83: #{tpu_custom_call.1} parent=5 // pred_region
        %s885 = ssub.s32 %s20, 2
        // Predicated region
        $region85: #{tpu_custom_call.1} parent=83 // pred_check
          %p886 = pneg %p318
        $region86: #{tpu_custom_call.1} parent=83 // pred_check_branch
          %888 = sbr.rel (%p886) target = $region88
        $region87: #{tpu_custom_call.1} parent=83 // pred_region
          %s889 = sand.u32 %s303, 1
          %s890 = scalar_lea.sflag [#allocation6], %s889
          %s891 = sand.u32 %s303, 1
          %s892 = smul.addr %s891, 8
          %s893 = scalar_lea.vmem [#allocation5], %s892
          %894 = dma.done %s890, 128
        $region88: #{tpu_custom_call.1} parent=83 // pred_fallthru
          _
      $region84: #{tpu_custom_call.1} parent=5 // pred_fallthru
        _
    $region6: #{tpu_custom_call.1} parent=1 // loop_footer
      %s24 = sadd.s32 1, %s20
    $region7: #{tpu_custom_call.1} parent=1 // loop_footer_branch
      %19 = sbr.rel target = $region3
    $region8: #{tpu_custom_call.1} parent=1 // loop_exit
      _
    %895 = vsyncpa [#allocation6], 1
    %s896 = scalar_lea.sflag [#allocation6], 1
    %897 = vsyncpa %s896, 1

</llo_original>
